<compile_context>
chip_gen: v6e
topology: v6e:2x2x1
jax: 0.10.0
libtpu: 0.0.40
codegen_flags: <defaults>
</compile_context>

<pallas_src>
import functools

import jax
import jax.numpy as jnp
from jax.experimental import pallas as pl
from jax.experimental.pallas import tpu as pltpu


# ---------------------------------------------------------------------------
# Kernel
# ---------------------------------------------------------------------------
def mlp_generator_kernel(x_ref, w1_ref, w2_ref, w3_ref, w4_ref, b_ref, o_ref):
    """One row-tile of the 4-layer MLP.  Weights are (in, out): y = x @ W + b.

    b_ref packs the four biases as rows 0..3 of a (4, hid_w) f32 array.
    All matmuls accumulate in f32 on the MXU; bias / ReLU math stays f32.
    """
    cdt = w1_ref.dtype  # MXU-input compute dtype (f32 exact path or bf16 fast path)

    h = jnp.dot(x_ref[...], w1_ref[...], preferred_element_type=jnp.float32)
    h = jnp.maximum(h + b_ref[0:1, :], 0.0)

    h = jnp.dot(h.astype(cdt), w2_ref[...], preferred_element_type=jnp.float32)
    h = jnp.maximum(h + b_ref[1:2, :], 0.0)

    h = jnp.dot(h.astype(cdt), w3_ref[...], preferred_element_type=jnp.float32)
    h = jnp.maximum(h + b_ref[2:3, :], 0.0)

    y = jnp.dot(h.astype(cdt), w4_ref[...], preferred_element_type=jnp.float32)
    o_ref[...] = (y + b_ref[3:4, :]).astype(o_ref.dtype)


# ---------------------------------------------------------------------------
# Wrapper helpers
# ---------------------------------------------------------------------------
def _round_up(x, m):
    return ((x + m - 1) // m) * m


def _choose_fold(out_dim):
    """Rows folded per 128-lane output row (1 if out_dim doesn't divide 128)."""
    if out_dim >= 128 or 128 % out_dim != 0:
        return 1
    return 128 // out_dim


def _choose_row_tile(folded_rows, max_tile):
    """Pick a folded-row tile (multiple of 8) and the padded row count.

    Aims for >= 8 grid steps (>= 4 per v7x TensorCore) so prefetch/writeback
    overlap compute; tiles of ~512-1024 rows already sit near the HBM roofline.
    """
    rows8 = _round_up(max(folded_rows, 1), 8)
    if rows8 <= 8:
        return 8, 8
    tile = max(8, min(max_tile, _round_up(pl.cdiv(rows8, 8), 8)))
    rows_padded = _round_up(rows8, tile)
    return tile, rows_padded


# ---------------------------------------------------------------------------
# Wrapper
# ---------------------------------------------------------------------------
@functools.partial(jax.jit, static_argnames=("tile_rows", "compute_dtype"))
def mlp_generator_forward(emb, params, *, tile_rows=1024,
                          compute_dtype=jnp.float32):
    """emb: (N, in_dim) f32.  params: dict with w1..w4 (in, out) and b1..b4."""
    N, in_dim = emb.shape
    out_dim = params["w1"].shape[1]
    out_dtype = emb.dtype
    cdt = jnp.dtype(compute_dtype)
    csize = cdt.itemsize
    osize = jnp.dtype(out_dtype).itemsize

    fold = _choose_fold(out_dim)
    in_w = fold * in_dim                       # folded input width (full-width block)
    # Lane-dense hidden width.  (On v6e/v7x, widths in (128, 256] round to 256,
    # which also matches their 256-wide MXU tile.)
    hid_w = _round_up(fold * out_dim, 128)

    folded_rows = pl.cdiv(N, fold)
    tile, frows_padded = _choose_row_tile(folded_rows, tile_rows)
    rows_padded = frows_padded * fold
    grid = frows_padded // tile

    # --- input: cast, pad rows with zeros, fold `fold` logical rows per
    #     128-lane row.  The reshape is contiguous, i.e. free in XLA.
    x = emb.astype(cdt)
    if rows_padded != N:
        x = jnp.pad(x, ((0, rows_padded - N), (0, 0)))
    x = x.reshape(frows_padded, in_w)

    # --- weights: block-diagonal kron(I_fold, W), zero-padded to hid_w.
    eye = jnp.eye(fold, dtype=jnp.float32)

    def blk(w, rows_to):
        wb = jnp.kron(eye, w.astype(jnp.float32))
        r, c = wb.shape
        wb = jnp.pad(wb, ((0, rows_to - r), (0, hid_w - c)))
        return wb.astype(cdt)

    w1 = blk(params["w1"], in_w)        # (in_w,  hid_w)
    w2 = blk(params["w2"], hid_w)       # (hid_w, hid_w)
    w3 = blk(params["w3"], hid_w)
    w4 = blk(params["w4"], hid_w)

    # --- biases: tile along the fold, pad to hid_w, pack into one (4, hid_w).
    def bias(b):
        bb = jnp.tile(b.astype(jnp.float32), fold)
        return jnp.pad(bb, (0, hid_w - bb.shape[0]))

    b_packed = jnp.stack([bias(params["b1"]), bias(params["b2"]),
                          bias(params["b3"]), bias(params["b4"])])  # (4, hid_w) f32

    # --- specs
    rep = lambda i: (0, 0)              # grid-resident weights / biases
    in_specs = [
        pl.BlockSpec((tile, in_w), lambda i: (i, 0)),   # folded emb rows (streamed)
        pl.BlockSpec((in_w, hid_w), rep),               # w1 (block-diag)
        pl.BlockSpec((hid_w, hid_w), rep),              # w2
        pl.BlockSpec((hid_w, hid_w), rep),              # w3
        pl.BlockSpec((hid_w, hid_w), rep),              # w4
        pl.BlockSpec((4, hid_w), rep),                  # packed biases (f32)
    ]
    out_spec = pl.BlockSpec((tile, hid_w), lambda i: (i, 0))

    # --- cost estimate + explicit VMEM budget
    weight_elems = in_w * hid_w + 3 * hid_w * hid_w
    flops = 2 * frows_padded * weight_elems
    bytes_accessed = (frows_padded * in_w * csize
                      + frows_padded * hid_w * osize
                      + weight_elems * csize + 4 * hid_w * 4)
    cost = pl.CostEstimate(flops=flops, transcendentals=0,
                           bytes_accessed=bytes_accessed)

    footprint = (2 * tile * in_w * csize            # double-buffered x tiles
                 + 2 * tile * hid_w * osize         # double-buffered out tiles
                 + 2 * (weight_elems * csize + 4 * hid_w * 4)  # resident weights
                 + 4 * tile * hid_w * 4)            # f32 intermediates headroom
    vmem_limit = int(min(48 * 2**20, max(footprint * 5 // 4 + (1 << 20), 16 * 2**20)))

    y = pl.pallas_call(
        mlp_generator_kernel,
        out_shape=jax.ShapeDtypeStruct((frows_padded, hid_w), out_dtype),
        grid=(grid,),
        in_specs=in_specs,
        out_specs=out_spec,
        compiler_params=pltpu.CompilerParams(
            dimension_semantics=("parallel",),
            vmem_limit_bytes=vmem_limit),
        cost_estimate=cost,
    )(x, w1, w2, w3, w4, b_packed)

    # --- unfold: (frows_padded, fold*out_dim) -> (rows_padded, out_dim), trim pad.
    y = y[:, :fold * out_dim]
    y = y.reshape(rows_padded, out_dim)
    return y[:N]


# ---------------------------------------------------------------------------
# Init + pure-JAX reference
# ---------------------------------------------------------------------------
def init_params(key, in_dim, out_dim):
    """Mimics nn.Linear's uniform(-1/sqrt(fan_in), 1/sqrt(fan_in)) init."""
    ks = jax.random.split(key, 8)

    def lin(kw, kb, fan_in, fan_out):
        bound = 1.0 / jnp.sqrt(fan_in)
        w = jax.random.uniform(kw, (fan_in, fan_out), jnp.float32, -bound, bound)
        b = jax.random.uniform(kb, (fan_out,), jnp.float32, -bound, bound)
        return w, b

    w1, b1 = lin(ks[0], ks[1], in_dim, out_dim)
    w2, b2 = lin(ks[2], ks[3], out_dim, out_dim)
    w3, b3 = lin(ks[4], ks[5], out_dim, out_dim)
    w4, b4 = lin(ks[6], ks[7], out_dim, out_dim)
    return dict(w1=w1, b1=b1, w2=w2, b2=b2, w3=w3, b3=b3, w4=w4, b4=b4)


def reference_forward(emb, p):
    """Pure-JAX f32 reference of the PyTorch module forward."""
    h = jax.nn.relu(emb @ p["w1"] + p["b1"])
    h = jax.nn.relu(h @ p["w2"] + p["b2"])
    h = jax.nn.relu(h @ p["w3"] + p["b3"])
    return h @ p["w4"] + p["b4"]


# ---------------------------------------------------------------------------
# Self-test
# ---------------------------------------------------------------------------
if __name__ == "__main__":
    root = jax.random.PRNGKey(0)

    def run_case(idx, n, in_dim, out_dim):
        kx, kp = jax.random.split(jax.random.fold_in(root, idx))
        emb = jax.random.normal(kx, (n, in_dim), dtype=jnp.float32)
        params = init_params(kp, in_dim, out_dim)
        ref = reference_forward(emb, params)
        out = jax.block_until_ready(mlp_generator_forward(emb, params))
        assert out.shape == (n, out_dim)
        assert jnp.allclose(out, ref, atol=1e-3, rtol=1e-3), \
            f"f32 path mismatch (n={n}, in={in_dim}, out={out_dim})"
        return emb, params, ref

    # Primary GAD-NR-like config (fold=4: four rows packed per 128-lane row).
    emb, params, ref = run_case(0, 16, 32, 32)

    # Explicit bf16 fast path (f32 MXU accumulation), relaxed tolerance.
    out_bf16 = jax.block_until_ready(
        mlp_generator_forward(emb, params, compute_dtype=jnp.bfloat16))
    assert out_bf16.shape == ref.shape
    assert jnp.allclose(out_bf16, ref, atol=5e-2, rtol=5e-2), "bf16 path mismatch"

    # Fallback path: out_dim does not divide 128 -> fold=1, hidden width padded.
    run_case(1, 37, 24, 48)

    # fold=2 path with row padding and several grid steps.
    run_case(2, 300, 32, 64)

    print("KERNEL_OK")
</pallas_src>

<mosaic_0001>
module attributes {stable_mosaic.version = 11 : i64} {
  func.func @mlp_generator_kernel(%arg0: i32, %arg1: memref<8x128xf32, #tpu.memory_space<vmem>>, %arg2: memref<128x128xf32, #tpu.memory_space<vmem>>, %arg3: memref<128x128xf32, #tpu.memory_space<vmem>>, %arg4: memref<128x128xf32, #tpu.memory_space<vmem>>, %arg5: memref<128x128xf32, #tpu.memory_space<vmem>>, %arg6: memref<4x128xf32, #tpu.memory_space<vmem>>, %arg7: memref<8x128xf32, #tpu.memory_space<vmem>>) attributes {dimension_semantics = [#tpu.dimension_semantics<parallel>], iteration_bounds = array<i64: 1>, scalar_prefetch = 0 : i64, scratch_operands = 0 : i64, tpu.core_type = #tpu.core_type<tc>, window_params = [{transform_indices = @transform_0, window_bounds = array<i64: 8, 128>}, {pipeline_mode = #tpu.pipeline_mode<synchronous>, transform_indices = @transform_1, window_bounds = array<i64: 128, 128>}, {pipeline_mode = #tpu.pipeline_mode<synchronous>, transform_indices = @transform_2, window_bounds = array<i64: 128, 128>}, {pipeline_mode = #tpu.pipeline_mode<synchronous>, transform_indices = @transform_3, window_bounds = array<i64: 128, 128>}, {pipeline_mode = #tpu.pipeline_mode<synchronous>, transform_indices = @transform_4, window_bounds = array<i64: 128, 128>}, {pipeline_mode = #tpu.pipeline_mode<synchronous>, transform_indices = @transform_5, window_bounds = array<i64: 4, 128>}, {transform_indices = @transform_6, window_bounds = array<i64: 8, 128>}]} {
    %c0 = arith.constant 0 : index
    %c0_0 = arith.constant 0 : index
    %0 = vector.load %arg1[%c0, %c0_0] : memref<8x128xf32, #tpu.memory_space<vmem>>, vector<8x128xf32>
    %c0_1 = arith.constant 0 : index
    %c0_2 = arith.constant 0 : index
    %1 = vector.load %arg2[%c0_1, %c0_2] : memref<128x128xf32, #tpu.memory_space<vmem>>, vector<128x128xf32>
    %cst = arith.constant dense<0.000000e+00> : vector<8x128xf32>
    %2 = tpu.matmul %0, %1, %cst {dimension_numbers = #tpu.dot_dimension_numbers<[1], [0], [0], [1], [0, 0, 1, 1], [], []>} : vector<8x128xf32>, vector<128x128xf32>, vector<8x128xf32> -> vector<8x128xf32>
    %c0_3 = arith.constant 0 : index
    %c0_4 = arith.constant 0 : index
    %3 = vector.load %arg6[%c0_3, %c0_4] : memref<4x128xf32, #tpu.memory_space<vmem>>, vector<1x128xf32>
    %4 = vector.broadcast %3 : vector<1x128xf32> to vector<8x128xf32>
    %5 = arith.addf %2, %4 : vector<8x128xf32>
    %cst_5 = arith.constant 0.000000e+00 : f32
    %6 = vector.broadcast %cst_5 : f32 to vector<8x128xf32>
    %7 = arith.maximumf %5, %6 : vector<8x128xf32>
    %c0_6 = arith.constant 0 : index
    %c0_7 = arith.constant 0 : index
    %8 = vector.load %arg3[%c0_6, %c0_7] : memref<128x128xf32, #tpu.memory_space<vmem>>, vector<128x128xf32>
    %cst_8 = arith.constant dense<0.000000e+00> : vector<8x128xf32>
    %9 = tpu.matmul %7, %8, %cst_8 {dimension_numbers = #tpu.dot_dimension_numbers<[1], [0], [0], [1], [0, 0, 1, 1], [], []>} : vector<8x128xf32>, vector<128x128xf32>, vector<8x128xf32> -> vector<8x128xf32>
    %c1 = arith.constant 1 : index
    %c0_9 = arith.constant 0 : index
    %10 = vector.load %arg6[%c1, %c0_9] : memref<4x128xf32, #tpu.memory_space<vmem>>, vector<1x128xf32>
    %11 = vector.broadcast %10 : vector<1x128xf32> to vector<8x128xf32>
    %12 = arith.addf %9, %11 : vector<8x128xf32>
    %cst_10 = arith.constant 0.000000e+00 : f32
    %13 = vector.broadcast %cst_10 : f32 to vector<8x128xf32>
    %14 = arith.maximumf %12, %13 : vector<8x128xf32>
    %c0_11 = arith.constant 0 : index
    %c0_12 = arith.constant 0 : index
    %15 = vector.load %arg4[%c0_11, %c0_12] : memref<128x128xf32, #tpu.memory_space<vmem>>, vector<128x128xf32>
    %cst_13 = arith.constant dense<0.000000e+00> : vector<8x128xf32>
    %16 = tpu.matmul %14, %15, %cst_13 {dimension_numbers = #tpu.dot_dimension_numbers<[1], [0], [0], [1], [0, 0, 1, 1], [], []>} : vector<8x128xf32>, vector<128x128xf32>, vector<8x128xf32> -> vector<8x128xf32>
    %c2 = arith.constant 2 : index
    %c0_14 = arith.constant 0 : index
    %17 = vector.load %arg6[%c2, %c0_14] : memref<4x128xf32, #tpu.memory_space<vmem>>, vector<1x128xf32>
    %18 = vector.broadcast %17 : vector<1x128xf32> to vector<8x128xf32>
    %19 = arith.addf %16, %18 : vector<8x128xf32>
    %cst_15 = arith.constant 0.000000e+00 : f32
    %20 = vector.broadcast %cst_15 : f32 to vector<8x128xf32>
    %21 = arith.maximumf %19, %20 : vector<8x128xf32>
    %c0_16 = arith.constant 0 : index
    %c0_17 = arith.constant 0 : index
    %22 = vector.load %arg5[%c0_16, %c0_17] : memref<128x128xf32, #tpu.memory_space<vmem>>, vector<128x128xf32>
    %cst_18 = arith.constant dense<0.000000e+00> : vector<8x128xf32>
    %23 = tpu.matmul %21, %22, %cst_18 {dimension_numbers = #tpu.dot_dimension_numbers<[1], [0], [0], [1], [0, 0, 1, 1], [], []>} : vector<8x128xf32>, vector<128x128xf32>, vector<8x128xf32> -> vector<8x128xf32>
    %c3 = arith.constant 3 : index
    %c0_19 = arith.constant 0 : index
    %24 = vector.load %arg6[%c3, %c0_19] : memref<4x128xf32, #tpu.memory_space<vmem>>, vector<1x128xf32>
    %25 = vector.broadcast %24 : vector<1x128xf32> to vector<8x128xf32>
    %26 = arith.addf %23, %25 : vector<8x128xf32>
    %c0_20 = arith.constant 0 : index
    %c0_21 = arith.constant 0 : index
    %27 = vector.load %arg7[%c0_20, %c0_21] : memref<8x128xf32, #tpu.memory_space<vmem>>, vector<8x128xf32>
    tpu.vector_store %arg7[%c0_20, %c0_21], %26 {strides = array<i32>} : memref<8x128xf32, #tpu.memory_space<vmem>>, vector<8x128xf32>,
    return
  }
  func.func @transform_0(%arg0: i32) -> (i32, i32) {
    %c0_i32 = arith.constant 0 : i32
    %c0_i32_0 = arith.constant 0 : i32
    return %arg0, %c0_i32 : i32, i32
  }
  func.func @transform_1(%arg0: i32) -> (i32, i32) {
    %c0_i32 = arith.constant 0 : i32
    %c0_i32_0 = arith.constant 0 : i32
    %c0_i32_1 = arith.constant 0 : i32
    return %c0_i32, %c0_i32_0 : i32, i32
  }
  func.func @transform_2(%arg0: i32) -> (i32, i32) {
    %c0_i32 = arith.constant 0 : i32
    %c0_i32_0 = arith.constant 0 : i32
    %c0_i32_1 = arith.constant 0 : i32
    return %c0_i32, %c0_i32_0 : i32, i32
  }
  func.func @transform_3(%arg0: i32) -> (i32, i32) {
    %c0_i32 = arith.constant 0 : i32
    %c0_i32_0 = arith.constant 0 : i32
    %c0_i32_1 = arith.constant 0 : i32
    return %c0_i32, %c0_i32_0 : i32, i32
  }
  func.func @transform_4(%arg0: i32) -> (i32, i32) {
    %c0_i32 = arith.constant 0 : i32
    %c0_i32_0 = arith.constant 0 : i32
    %c0_i32_1 = arith.constant 0 : i32
    return %c0_i32, %c0_i32_0 : i32, i32
  }
  func.func @transform_5(%arg0: i32) -> (i32, i32) {
    %c0_i32 = arith.constant 0 : i32
    %c0_i32_0 = arith.constant 0 : i32
    %c0_i32_1 = arith.constant 0 : i32
    return %c0_i32, %c0_i32_0 : i32, i32
  }
  func.func @transform_6(%arg0: i32) -> (i32, i32) {
    %c0_i32 = arith.constant 0 : i32
    %c0_i32_0 = arith.constant 0 : i32
    return %arg0, %c0_i32 : i32, i32
  }
}

</mosaic_0001>

<llo_original>
// kernel: tile.33
$region0: #{tile.33}
  #allocation0 [shape = 's32[1]{0}', space=sflag, size = 0x4, scoped, tag = 'scoped memory for tile.33']
  %s0 = inlined_call_operand.vmem [shape: f32[32], index: 0, kind: input, shape index: {}]
  %s1 = inlined_call_operand.vmem [shape: f32[4,32], index: 1, kind: output, shape index: {}]
  // Predicated region
  $region2: #{tile.33} parent=0 // pred_check
    _
  $region3: #{tile.33} parent=0 // pred_check_branch
    %3 = sbr.rel (0) target = $region5
  $region4: #{tile.33} parent=0 // pred_region
    _
  $region5: #{tile.33} parent=0 // pred_fallthru
    _
  %v4 = vld [vmem:[%s0] ss:$0 sm:$0xff]
  %5 = vst [vmem:[%s1] sm:$0xf] %v4

// kernel: mlp_generator_forward.1
$region0: #{mlp_generator_forward.1}
  #allocation0 [shape = 'u32[]', space=smem, size = 0x4, offset = 0x4, fixed_abs, tag = 'smem constant byte address 0x4 - core index']
  #allocation1 [shape = 'u32[144,128]{1,0:T(1,128)}', space=vmem, size = 0x12000, scoped, tag = 'internal scratch']
  %s0 = inlined_call_operand.vmem [shape: f32[8,128], index: 0, kind: input, shape index: {}]
  %s1 = inlined_call_operand.vmem [shape: f32[128,128], index: 1, kind: input, shape index: {}]
  %s2 = inlined_call_operand.vmem [shape: f32[128,128], index: 2, kind: input, shape index: {}]
  %s3 = inlined_call_operand.vmem [shape: f32[128,128], index: 3, kind: input, shape index: {}]
  %s4 = inlined_call_operand.vmem [shape: f32[128,128], index: 4, kind: input, shape index: {}]
  %s5 = inlined_call_operand.vmem [shape: f32[4,128], index: 5, kind: input, shape index: {}]
  %s6 = inlined_call_operand.vmem [shape: f32[8,128], index: 6, kind: output, shape index: {}]
  %s7 = sld [smem:[#allocation0]]
  $region34: #{mlp_generator_forward.1} parent=0
    _
  %s9 = ssub.s32 1, %s7
  %s10 = scalar_select 0, %s9, %s7
  // Predicated region
  $region2: #{mlp_generator_forward.1} parent=0 // pred_check
    _
  $region3: #{mlp_generator_forward.1} parent=0 // pred_check_branch
    %12 = sbr.rel (0) target = $region5
  $region4: #{mlp_generator_forward.1} parent=0 // pred_region
    _
  $region5: #{mlp_generator_forward.1} parent=0 // pred_fallthru
    _
  // Predicated region
  $region6: #{mlp_generator_forward.1} parent=0 // pred_check
    _
  $region7: #{mlp_generator_forward.1} parent=0 // pred_check_branch
    %14 = sbr.rel (0) target = $region9
  $region8: #{mlp_generator_forward.1} parent=0 // pred_region
    _
  $region9: #{mlp_generator_forward.1} parent=0 // pred_fallthru
    _
  // Predicated region
  $region10: #{mlp_generator_forward.1} parent=0 // pred_check
    _
  $region11: #{mlp_generator_forward.1} parent=0 // pred_check_branch
    %16 = sbr.rel (0) target = $region13
  $region12: #{mlp_generator_forward.1} parent=0 // pred_region
    _
  $region13: #{mlp_generator_forward.1} parent=0 // pred_fallthru
    _
  // Predicated region
  $region14: #{mlp_generator_forward.1} parent=0 // pred_check
    _
  $region15: #{mlp_generator_forward.1} parent=0 // pred_check_branch
    %18 = sbr.rel (0) target = $region17
  $region16: #{mlp_generator_forward.1} parent=0 // pred_region
    _
  $region17: #{mlp_generator_forward.1} parent=0 // pred_fallthru
    _
  // Predicated region
  $region18: #{mlp_generator_forward.1} parent=0 // pred_check
    _
  $region19: #{mlp_generator_forward.1} parent=0 // pred_check_branch
    %20 = sbr.rel (0) target = $region21
  $region20: #{mlp_generator_forward.1} parent=0 // pred_region
    _
  $region21: #{mlp_generator_forward.1} parent=0 // pred_fallthru
    _
  // Predicated region
  $region22: #{mlp_generator_forward.1} parent=0 // pred_check
    _
  $region23: #{mlp_generator_forward.1} parent=0 // pred_check_branch
    %22 = sbr.rel (0) target = $region25
  $region24: #{mlp_generator_forward.1} parent=0 // pred_region
    _
  $region25: #{mlp_generator_forward.1} parent=0 // pred_fallthru
    _
  %v23 = vld [vmem:[%s0] sm:$0xff]
  %v24 = vld [vmem:[%s1] sm:$0xff]
  %v25 = vld [vmem:[%s1 + $0x8] sm:$0xff]
  %v26 = vld [vmem:[%s1 + $0x10] sm:$0xff]
  %v27 = vld [vmem:[%s1 + $0x18] sm:$0xff]
  %v28 = vld [vmem:[%s1 + $0x20] sm:$0xff]
  %v29 = vld [vmem:[%s1 + $0x28] sm:$0xff]
  %v30 = vld [vmem:[%s1 + $0x30] sm:$0xff]
  %v31 = vld [vmem:[%s1 + $0x38] sm:$0xff]
  %v32 = vld [vmem:[%s1 + $0x40] sm:$0xff]
  %v33 = vld [vmem:[%s1 + $0x48] sm:$0xff]
  %v34 = vld [vmem:[%s1 + $0x50] sm:$0xff]
  %v35 = vld [vmem:[%s1 + $0x58] sm:$0xff]
  %v36 = vld [vmem:[%s1 + $0x60] sm:$0xff]
  %v37 = vld [vmem:[%s1 + $0x68] sm:$0xff]
  %v38 = vld [vmem:[%s1 + $0x70] sm:$0xff]
  %v39 = vld [vmem:[%s1 + $0x78] sm:$0xff]
  %v40 = vld [vmem:[%s5] sm:$0x1]
  %v41 = vlaneseq
  %v42 = vshrl.u32 %v41, 7
  %v43 = vsub.s32 0, %v42
  %v44 = vrot.slane %v40, %v43
  %45 = vmatprep.subr.mxu0 0.0
  %46 = vmatpush1.msra.mxu0 %v39
  %47 = vmatprep.subr.mxu0 0.0
  %48 = vmatpush1.msra.mxu0 %v38
  %49 = vmatprep.subr.mxu0 0.0
  %50 = vmatpush1.msra.mxu0 %v37
  %51 = vmatprep.subr.mxu0 0.0
  %52 = vmatpush1.msra.mxu0 %v36
  %53 = vmatprep.subr.mxu0 0.0
  %54 = vmatpush1.msra.mxu0 %v35
  %55 = vmatprep.subr.mxu0 0.0
  %56 = vmatpush1.msra.mxu0 %v34
  %57 = vmatprep.subr.mxu0 0.0
  %58 = vmatpush1.msra.mxu0 %v33
  %59 = vmatprep.subr.mxu0 0.0
  %60 = vmatpush1.msra.mxu0 %v32
  %61 = vmatprep.subr.mxu0 0.0
  %62 = vmatpush1.msra.mxu0 %v31
  %63 = vmatprep.subr.mxu0 0.0
  %64 = vmatpush1.msra.mxu0 %v30
  %65 = vmatprep.subr.mxu0 0.0
  %66 = vmatpush1.msra.mxu0 %v29
  %67 = vmatprep.subr.mxu0 0.0
  %68 = vmatpush1.msra.mxu0 %v28
  %69 = vmatprep.subr.mxu0 0.0
  %70 = vmatpush1.msra.mxu0 %v27
  %71 = vmatprep.subr.mxu0 0.0
  %72 = vmatpush1.msra.mxu0 %v26
  %73 = vmatprep.subr.mxu0 0.0
  %74 = vmatpush1.msra.mxu0 %v25
  %75 = vmatprep.subr.mxu0 0.0
  %76 = vmatpush1.msra.mxu0 %v24
  %77 = vmatprep.subr.mxu0 0.0
  %78 = vmatpush2.msra.mxu0 0.0
  %79 = vmatprep.subr.mxu0 0.0
  %80 = vmatpush2.msra.mxu0 0.0
  %81 = vmatprep.subr.mxu0 0.0
  %82 = vmatpush2.msra.mxu0 0.0
  %83 = vmatprep.subr.mxu0 0.0
  %84 = vmatpush2.msra.mxu0 0.0
  %85 = vmatprep.subr.mxu0 0.0
  %86 = vmatpush2.msra.mxu0 0.0
  %87 = vmatprep.subr.mxu0 0.0
  %88 = vmatpush2.msra.mxu0 0.0
  %89 = vmatprep.subr.mxu0 0.0
  %90 = vmatpush2.msra.mxu0 0.0
  %91 = vmatprep.subr.mxu0 0.0
  %92 = vmatpush2.msra.mxu0 0.0
  %93 = vmatprep.subr.mxu0 0.0
  %94 = vmatpush2.msra.mxu0 0.0
  %95 = vmatprep.subr.mxu0 0.0
  %96 = vmatpush2.msra.mxu0 0.0
  %97 = vmatprep.subr.mxu0 0.0
  %98 = vmatpush2.msra.mxu0 0.0
  %99 = vmatprep.subr.mxu0 0.0
  %100 = vmatpush2.msra.mxu0 0.0
  %101 = vmatprep.subr.mxu0 0.0
  %102 = vmatpush2.msra.mxu0 0.0
  %103 = vmatprep.subr.mxu0 0.0
  %104 = vmatpush2.msra.mxu0 0.0
  %105 = vmatprep.subr.mxu0 0.0
  %106 = vmatpush2.msra.mxu0 0.0
  %107 = vmatprep.subr.mxu0 0.0
  %108 = vmatpush2.msra.mxu0 0.0
  %109 = vmatprep.mubr.f32.mxu0 0.0
  %110 = vmatmul.mubr.f32.gmra.mxu0 %v23
  %v111 = vpop.f32.mrf.mxu0
  %v112 = vadd.f32 %v44, %v111
  %v113 = vpop.f32.mrf.mxu0
  %114 = vdwg.mxu0
  %v115 = vmax.f32 %v112, 0.0
  %v116 = vld [vmem:[%s2] sm:$0xff]
  %v117 = vld [vmem:[%s2 + $0x8] sm:$0xff]
  %v118 = vld [vmem:[%s2 + $0x10] sm:$0xff]
  %v119 = vld [vmem:[%s2 + $0x18] sm:$0xff]
  %v120 = vld [vmem:[%s2 + $0x20] sm:$0xff]
  %v121 = vld [vmem:[%s2 + $0x28] sm:$0xff]
  %v122 = vld [vmem:[%s2 + $0x30] sm:$0xff]
  %v123 = vld [vmem:[%s2 + $0x38] sm:$0xff]
  %v124 = vld [vmem:[%s2 + $0x40] sm:$0xff]
  %v125 = vld [vmem:[%s2 + $0x48] sm:$0xff]
  %v126 = vld [vmem:[%s2 + $0x50] sm:$0xff]
  %v127 = vld [vmem:[%s2 + $0x58] sm:$0xff]
  %v128 = vld [vmem:[%s2 + $0x60] sm:$0xff]
  %v129 = vld [vmem:[%s2 + $0x68] sm:$0xff]
  %v130 = vld [vmem:[%s2 + $0x70] sm:$0xff]
  %v131 = vld [vmem:[%s2 + $0x78] sm:$0xff]
  %v132 = vld [vmem:[%s5 + $0x1] sm:$0x1]
  %v133 = vlaneseq
  %v134 = vshrl.u32 %v133, 7
  %v135 = vsub.s32 0, %v134
  %v136 = vrot.slane %v132, %v135
  %137 = vmatprep.subr.mxu0 0.0
  %138 = vmatpush1.msra.mxu0 %v131
  %139 = vmatprep.subr.mxu0 0.0
  %140 = vmatpush1.msra.mxu0 %v130
  %141 = vmatprep.subr.mxu0 0.0
  %142 = vmatpush1.msra.mxu0 %v129
  %143 = vmatprep.subr.mxu0 0.0
  %144 = vmatpush1.msra.mxu0 %v128
  %145 = vmatprep.subr.mxu0 0.0
  %146 = vmatpush1.msra.mxu0 %v127
  %147 = vmatprep.subr.mxu0 0.0
  %148 = vmatpush1.msra.mxu0 %v126
  %149 = vmatprep.subr.mxu0 0.0
  %150 = vmatpush1.msra.mxu0 %v125
  %151 = vmatprep.subr.mxu0 0.0
  %152 = vmatpush1.msra.mxu0 %v124
  %153 = vmatprep.subr.mxu0 0.0
  %154 = vmatpush1.msra.mxu0 %v123
  %155 = vmatprep.subr.mxu0 0.0
  %156 = vmatpush1.msra.mxu0 %v122
  %157 = vmatprep.subr.mxu0 0.0
  %158 = vmatpush1.msra.mxu0 %v121
  %159 = vmatprep.subr.mxu0 0.0
  %160 = vmatpush1.msra.mxu0 %v120
  %161 = vmatprep.subr.mxu0 0.0
  %162 = vmatpush1.msra.mxu0 %v119
  %163 = vmatprep.subr.mxu0 0.0
  %164 = vmatpush1.msra.mxu0 %v118
  %165 = vmatprep.subr.mxu0 0.0
  %166 = vmatpush1.msra.mxu0 %v117
  %167 = vmatprep.subr.mxu0 0.0
  %168 = vmatpush1.msra.mxu0 %v116
  %169 = vmatprep.subr.mxu0 0.0
  %170 = vmatpush2.msra.mxu0 0.0
  %171 = vmatprep.subr.mxu0 0.0
  %172 = vmatpush2.msra.mxu0 0.0
  %173 = vmatprep.subr.mxu0 0.0
  %174 = vmatpush2.msra.mxu0 0.0
  %175 = vmatprep.subr.mxu0 0.0
  %176 = vmatpush2.msra.mxu0 0.0
  %177 = vmatprep.subr.mxu0 0.0
  %178 = vmatpush2.msra.mxu0 0.0
  %179 = vmatprep.subr.mxu0 0.0
  %180 = vmatpush2.msra.mxu0 0.0
  %181 = vmatprep.subr.mxu0 0.0
  %182 = vmatpush2.msra.mxu0 0.0
  %183 = vmatprep.subr.mxu0 0.0
  %184 = vmatpush2.msra.mxu0 0.0
  %185 = vmatprep.subr.mxu0 0.0
  %186 = vmatpush2.msra.mxu0 0.0
  %187 = vmatprep.subr.mxu0 0.0
  %188 = vmatpush2.msra.mxu0 0.0
  %189 = vmatprep.subr.mxu0 0.0
  %190 = vmatpush2.msra.mxu0 0.0
  %191 = vmatprep.subr.mxu0 0.0
  %192 = vmatpush2.msra.mxu0 0.0
  %193 = vmatprep.subr.mxu0 0.0
  %194 = vmatpush2.msra.mxu0 0.0
  %195 = vmatprep.subr.mxu0 0.0
  %196 = vmatpush2.msra.mxu0 0.0
  %197 = vmatprep.subr.mxu0 0.0
  %198 = vmatpush2.msra.mxu0 0.0
  %199 = vmatprep.subr.mxu0 0.0
  %200 = vmatpush2.msra.mxu0 0.0
  %201 = vmatprep.mubr.f32.mxu0 0.0
  %202 = vmatmul.mubr.f32.gmra.mxu0 %v115
  %v203 = vpop.f32.mrf.mxu0
  %v204 = vadd.f32 %v136, %v203
  %v205 = vpop.f32.mrf.mxu0
  %206 = vdwg.mxu0
  %v207 = vmax.f32 %v204, 0.0
  %v208 = vld [vmem:[%s3] sm:$0xff]
  %v209 = vld [vmem:[%s3 + $0x8] sm:$0xff]
  %v210 = vld [vmem:[%s3 + $0x10] sm:$0xff]
  %v211 = vld [vmem:[%s3 + $0x18] sm:$0xff]
  %v212 = vld [vmem:[%s3 + $0x20] sm:$0xff]
  %v213 = vld [vmem:[%s3 + $0x28] sm:$0xff]
  %v214 = vld [vmem:[%s3 + $0x30] sm:$0xff]
  %v215 = vld [vmem:[%s3 + $0x38] sm:$0xff]
  %v216 = vld [vmem:[%s3 + $0x40] sm:$0xff]
  %v217 = vld [vmem:[%s3 + $0x48] sm:$0xff]
  %v218 = vld [vmem:[%s3 + $0x50] sm:$0xff]
  %v219 = vld [vmem:[%s3 + $0x58] sm:$0xff]
  %v220 = vld [vmem:[%s3 + $0x60] sm:$0xff]
  %v221 = vld [vmem:[%s3 + $0x68] sm:$0xff]
  %v222 = vld [vmem:[%s3 + $0x70] sm:$0xff]
  %v223 = vld [vmem:[%s3 + $0x78] sm:$0xff]
  %v224 = vld [vmem:[%s5 + $0x2] sm:$0x1]
  %v225 = vlaneseq
  %v226 = vshrl.u32 %v225, 7
  %v227 = vsub.s32 0, %v226
  %v228 = vrot.slane %v224, %v227
  %229 = vmatprep.subr.mxu0 0.0
  %230 = vmatpush1.msra.mxu0 %v223
  %231 = vmatprep.subr.mxu0 0.0
  %232 = vmatpush1.msra.mxu0 %v222
  %233 = vmatprep.subr.mxu0 0.0
  %234 = vmatpush1.msra.mxu0 %v221
  %235 = vmatprep.subr.mxu0 0.0
  %236 = vmatpush1.msra.mxu0 %v220
  %237 = vmatprep.subr.mxu0 0.0
  %238 = vmatpush1.msra.mxu0 %v219
  %239 = vmatprep.subr.mxu0 0.0
  %240 = vmatpush1.msra.mxu0 %v218
  %241 = vmatprep.subr.mxu0 0.0
  %242 = vmatpush1.msra.mxu0 %v217
  %243 = vmatprep.subr.mxu0 0.0
  %244 = vmatpush1.msra.mxu0 %v216
  %245 = vmatprep.subr.mxu0 0.0
  %246 = vmatpush1.msra.mxu0 %v215
  %247 = vmatprep.subr.mxu0 0.0
  %248 = vmatpush1.msra.mxu0 %v214
  %249 = vmatprep.subr.mxu0 0.0
  %250 = vmatpush1.msra.mxu0 %v213
  %251 = vmatprep.subr.mxu0 0.0
  %252 = vmatpush1.msra.mxu0 %v212
  %253 = vmatprep.subr.mxu0 0.0
  %254 = vmatpush1.msra.mxu0 %v211
  %255 = vmatprep.subr.mxu0 0.0
  %256 = vmatpush1.msra.mxu0 %v210
  %257 = vmatprep.subr.mxu0 0.0
  %258 = vmatpush1.msra.mxu0 %v209
  %259 = vmatprep.subr.mxu0 0.0
  %260 = vmatpush1.msra.mxu0 %v208
  %261 = vmatprep.subr.mxu0 0.0
  %262 = vmatpush2.msra.mxu0 0.0
  %263 = vmatprep.subr.mxu0 0.0
  %264 = vmatpush2.msra.mxu0 0.0
  %265 = vmatprep.subr.mxu0 0.0
  %266 = vmatpush2.msra.mxu0 0.0
  %267 = vmatprep.subr.mxu0 0.0
  %268 = vmatpush2.msra.mxu0 0.0
  %269 = vmatprep.subr.mxu0 0.0
  %270 = vmatpush2.msra.mxu0 0.0
  %271 = vmatprep.subr.mxu0 0.0
  %272 = vmatpush2.msra.mxu0 0.0
  %273 = vmatprep.subr.mxu0 0.0
  %274 = vmatpush2.msra.mxu0 0.0
  %275 = vmatprep.subr.mxu0 0.0
  %276 = vmatpush2.msra.mxu0 0.0
  %277 = vmatprep.subr.mxu0 0.0
  %278 = vmatpush2.msra.mxu0 0.0
  %279 = vmatprep.subr.mxu0 0.0
  %280 = vmatpush2.msra.mxu0 0.0
  %281 = vmatprep.subr.mxu0 0.0
  %282 = vmatpush2.msra.mxu0 0.0
  %283 = vmatprep.subr.mxu0 0.0
  %284 = vmatpush2.msra.mxu0 0.0
  %285 = vmatprep.subr.mxu0 0.0
  %286 = vmatpush2.msra.mxu0 0.0
  %287 = vmatprep.subr.mxu0 0.0
  %288 = vmatpush2.msra.mxu0 0.0
  %289 = vmatprep.subr.mxu0 0.0
  %290 = vmatpush2.msra.mxu0 0.0
  %291 = vmatprep.subr.mxu0 0.0
  %292 = vmatpush2.msra.mxu0 0.0
  %293 = vmatprep.mubr.f32.mxu0 0.0
  %294 = vmatmul.mubr.f32.gmra.mxu0 %v207
  %v295 = vpop.f32.mrf.mxu0
  %v296 = vadd.f32 %v228, %v295
  %v297 = vpop.f32.mrf.mxu0
  %298 = vdwg.mxu0
  %v299 = vmax.f32 %v296, 0.0
  %v300 = vld [vmem:[%s4] sm:$0xff]
  %v301 = vld [vmem:[%s4 + $0x8] sm:$0xff]
  %v302 = vld [vmem:[%s4 + $0x10] sm:$0xff]
  %v303 = vld [vmem:[%s4 + $0x18] sm:$0xff]
  %v304 = vld [vmem:[%s4 + $0x20] sm:$0xff]
  %v305 = vld [vmem:[%s4 + $0x28] sm:$0xff]
  %v306 = vld [vmem:[%s4 + $0x30] sm:$0xff]
  %v307 = vld [vmem:[%s4 + $0x38] sm:$0xff]
  %v308 = vld [vmem:[%s4 + $0x40] sm:$0xff]
  %v309 = vld [vmem:[%s4 + $0x48] sm:$0xff]
  %v310 = vld [vmem:[%s4 + $0x50] sm:$0xff]
  %v311 = vld [vmem:[%s4 + $0x58] sm:$0xff]
  %v312 = vld [vmem:[%s4 + $0x60] sm:$0xff]
  %v313 = vld [vmem:[%s4 + $0x68] sm:$0xff]
  %v314 = vld [vmem:[%s4 + $0x70] sm:$0xff]
  %v315 = vld [vmem:[%s4 + $0x78] sm:$0xff]
  %v316 = vld [vmem:[%s5 + $0x3] sm:$0x1]
  %v317 = vlaneseq
  %v318 = vshrl.u32 %v317, 7
  %v319 = vsub.s32 0, %v318
  %v320 = vrot.slane %v316, %v319
  %321 = vmatprep.subr.mxu0 0.0
  %322 = vmatpush1.msra.mxu0 %v315
  %323 = vmatprep.subr.mxu0 0.0
  %324 = vmatpush1.msra.mxu0 %v314
  %325 = vmatprep.subr.mxu0 0.0
  %326 = vmatpush1.msra.mxu0 %v313
  %327 = vmatprep.subr.mxu0 0.0
  %328 = vmatpush1.msra.mxu0 %v312
  %329 = vmatprep.subr.mxu0 0.0
  %330 = vmatpush1.msra.mxu0 %v311
  %331 = vmatprep.subr.mxu0 0.0
  %332 = vmatpush1.msra.mxu0 %v310
  %333 = vmatprep.subr.mxu0 0.0
  %334 = vmatpush1.msra.mxu0 %v309
  %335 = vmatprep.subr.mxu0 0.0
  %336 = vmatpush1.msra.mxu0 %v308
  %337 = vmatprep.subr.mxu0 0.0
  %338 = vmatpush1.msra.mxu0 %v307
  %339 = vmatprep.subr.mxu0 0.0
  %340 = vmatpush1.msra.mxu0 %v306
  %341 = vmatprep.subr.mxu0 0.0
  %342 = vmatpush1.msra.mxu0 %v305
  %343 = vmatprep.subr.mxu0 0.0
  %344 = vmatpush1.msra.mxu0 %v304
  %345 = vmatprep.subr.mxu0 0.0
  %346 = vmatpush1.msra.mxu0 %v303
  %347 = vmatprep.subr.mxu0 0.0
  %348 = vmatpush1.msra.mxu0 %v302
  %349 = vmatprep.subr.mxu0 0.0
  %350 = vmatpush1.msra.mxu0 %v301
  %351 = vmatprep.subr.mxu0 0.0
  %352 = vmatpush1.msra.mxu0 %v300
  %353 = vmatprep.subr.mxu0 0.0
  %354 = vmatpush2.msra.mxu0 0.0
  %355 = vmatprep.subr.mxu0 0.0
  %356 = vmatpush2.msra.mxu0 0.0
  %357 = vmatprep.subr.mxu0 0.0
  %358 = vmatpush2.msra.mxu0 0.0
  %359 = vmatprep.subr.mxu0 0.0
  %360 = vmatpush2.msra.mxu0 0.0
  %361 = vmatprep.subr.mxu0 0.0
  %362 = vmatpush2.msra.mxu0 0.0
  %363 = vmatprep.subr.mxu0 0.0
  %364 = vmatpush2.msra.mxu0 0.0
  %365 = vmatprep.subr.mxu0 0.0
  %366 = vmatpush2.msra.mxu0 0.0
  %367 = vmatprep.subr.mxu0 0.0
  %368 = vmatpush2.msra.mxu0 0.0
  %369 = vmatprep.subr.mxu0 0.0
  %370 = vmatpush2.msra.mxu0 0.0
  %371 = vmatprep.subr.mxu0 0.0
  %372 = vmatpush2.msra.mxu0 0.0
  %373 = vmatprep.subr.mxu0 0.0
  %374 = vmatpush2.msra.mxu0 0.0
  %375 = vmatprep.subr.mxu0 0.0
  %376 = vmatpush2.msra.mxu0 0.0
  %377 = vmatprep.subr.mxu0 0.0
  %378 = vmatpush2.msra.mxu0 0.0
  %379 = vmatprep.subr.mxu0 0.0
  %380 = vmatpush2.msra.mxu0 0.0
  %381 = vmatprep.subr.mxu0 0.0
  %382 = vmatpush2.msra.mxu0 0.0
  %383 = vmatprep.subr.mxu0 0.0
  %384 = vmatpush2.msra.mxu0 0.0
  %385 = vmatprep.mubr.f32.mxu0 0.0
  %386 = vmatmul.mubr.f32.gmra.mxu0 %v299
  %v387 = vpop.f32.mrf.mxu0
  %v388 = vadd.f32 %v320, %v387
  %v389 = vpop.f32.mrf.mxu0
  %390 = vdwg.mxu0
  %391 = vst [vmem:[%s6] sm:$0xff] %v388
  // Predicated region
  $region26: #{mlp_generator_forward.1} parent=0 // pred_check
    _
  $region27: #{mlp_generator_forward.1} parent=0 // pred_check_branch
    %393 = sbr.rel (0) target = $region29
  $region28: #{mlp_generator_forward.1} parent=0 // pred_region
    _
  $region29: #{mlp_generator_forward.1} parent=0 // pred_fallthru
    _
  // Predicated region
  $region30: #{mlp_generator_forward.1} parent=0 // pred_check
    _
  $region31: #{mlp_generator_forward.1} parent=0 // pred_check_branch
    %395 = sbr.rel (0) target = $region33
  $region32: #{mlp_generator_forward.1} parent=0 // pred_region
    _
  $region33: #{mlp_generator_forward.1} parent=0 // pred_fallthru
    _

</llo_original>
